<compile_context>
chip_gen: v5e
topology: v5e:2x2
jax: 0.10.0
libtpu: 0.0.40
codegen_flags: <defaults>
</compile_context>

<pallas_src>
import functools
import math

import jax
import jax.numpy as jnp
from jax.experimental import pallas as pl
from jax.experimental.pallas import tpu as pltpu


def _round_up(x, m):
    return (x + m - 1) // m * m


def _vmem_capacity_bytes():
    """Physical per-core VMEM; conservative 64 MiB (v7x) fallback."""
    try:
        return int(pltpu.get_tpu_info().vmem_capacity_bytes)
    except Exception:
        return 64 << 20


def _choose_block_n(N, T, D, Wtot, Kp, Vp, in_bytes, cd_bytes, out_bytes, budget):
    """Largest divisor of N whose working set fits the VMEM budget.

    Keeps >= 2 grid steps whenever N >= 2 so ("parallel",) can shard across
    v7x's two TensorCores (no-op on single-core v5e/v6e).
    """
    tq_guess = min(T, 256)
    for b in sorted({d for d in range(1, N + 1) if N % d == 0}, reverse=True):
        if N >= 2 and N // b < 2:
            continue
        est = (2 * b * T * D * in_bytes            # x double buffer
               + 2 * b * T * Vp * out_bytes        # output double buffer
               + D * Wtot * cd_bytes + Wtot * 4    # resident fused weight + bias
               + b * T * Wtot * 4                  # f32 qkv intermediate
               + b * T * (2 * Kp + Vp) * cd_bytes  # q/k/v compute-dtype views
               + 2 * b * tq_guess * T * 4          # score tile (s and p)
               + b * tq_guess * Vp * 4)            # per-tile attention accum
        if est <= budget * 0.8:
            return b
    return 1


def _choose_tq(T, block_n, Vp, score_budget):
    """Query-tile size: T if the full (T, T) scores fit, else a sublane-aligned divisor."""
    def cost(t):
        return block_n * (2 * t * T * 4 + t * Vp * 4)
    if cost(T) <= score_budget:
        return T
    cands = [d for d in range(8, T, 8) if T % d == 0]
    for t in sorted(cands, reverse=True):
        if cost(t) <= score_budget:
            return t
    return min(cands) if cands else T


def _attn_kernel(x_ref, w_ref, b_ref, o_ref, *, kp, vp, tq, compute_dtype):
    """One grid step processes a block of B batch elements.

    x_ref : (B, T, D)       VMEM (compute_dtype)
    w_ref : (D, 2*kp+vp)    VMEM fused zero-padded [scale*Wq | Wk | Wv]
    b_ref : (1, 2*kp+vp)    VMEM fused zero-padded [scale*bq | bk | bv] (f32)
    o_ref : (B, T, vp)      VMEM lane-dense (padded) output
    """
    B, T, D = x_ref.shape

    # Single fused QKV projection: one MXU pass.  (The (B,T,D)->(B*T,D) merge
    # is layout-free when T is a multiple of the sublane count; otherwise it is
    # a correct, slightly more expensive VMEM copy.)
    x2 = x_ref[...].reshape(B * T, D)
    qkv = jnp.dot(x2, w_ref[...], preferred_element_type=jnp.float32) + b_ref[...]
    qkv = qkv.reshape(B, T, 2 * kp + vp)

    # 128-aligned lane slices; 1/sqrt(k_dim) already folded into the q section.
    q = qkv[..., 0:kp].astype(compute_dtype)
    k = qkv[..., kp:2 * kp].astype(compute_dtype)
    v = qkv[..., 2 * kp:2 * kp + vp].astype(compute_dtype)

    # Query-tiled scores/softmax: live intermediate bounded by (B, tq, T).
    # Batched contraction over the last dims -> no explicit k transpose.
    for qi in range(T // tq):
        lo = qi * tq
        s = jnp.einsum("bqd,bkd->bqk", q[:, lo:lo + tq, :], k,
                       preferred_element_type=jnp.float32)
        s_max = jnp.max(s, axis=-1, keepdims=True)
        p = jnp.exp(s - s_max)
        p = p * pl.reciprocal(jnp.sum(p, axis=-1, keepdims=True), approx=True)
        out = jnp.einsum("bqk,bkd->bqd", p.astype(compute_dtype), v,
                         preferred_element_type=jnp.float32)
        o_ref[:, lo:lo + tq, :] = out.astype(o_ref.dtype)


def pack_qkv_params(wq, bq, wk, bk, wv, bv, *, k_dim, compute_dtype=jnp.float32):
    """Pack [Wq|Wk|Wv] (each section zero-padded to 128 lanes) ONCE at init time.

    1/sqrt(k_dim) is folded into the Wq/bq sections so the kernel has no extra
    VPU multiply.  Returns (w_fused, b_fused, meta_kwargs).
    """
    D, Kd = wq.shape
    Vd = wv.shape[1]
    assert Kd == k_dim
    Kp, Vp = _round_up(Kd, 128), _round_up(Vd, 128)
    Wtot = 2 * Kp + Vp
    scale = 1.0 / math.sqrt(k_dim)

    w = jnp.zeros((D, Wtot), compute_dtype)
    w = w.at[:, 0:Kd].set((wq * scale).astype(compute_dtype))
    w = w.at[:, Kp:Kp + Kd].set(wk.astype(compute_dtype))
    w = w.at[:, 2 * Kp:2 * Kp + Vd].set(wv.astype(compute_dtype))

    b = jnp.zeros((1, Wtot), jnp.float32)
    b = b.at[0, 0:Kd].set((bq * scale).astype(jnp.float32))
    b = b.at[0, Kp:Kp + Kd].set(bk.astype(jnp.float32))
    b = b.at[0, 2 * Kp:2 * Kp + Vd].set(bv.astype(jnp.float32))

    return w, b, dict(k_pad=Kp, v_pad=Vp, v_dim=Vd)


def self_attention_packed(x, w_fused, b_fused, *, k_pad, v_pad, v_dim,
                          compute_dtype=jnp.float32, out_dtype=None,
                          block_n=None, tq=None, return_padded=False):
    """x: (N, T, D); fused packed params from pack_qkv_params.  Returns (N, T, v_dim)."""
    N, T, D = x.shape
    Wtot = 2 * k_pad + v_pad
    assert w_fused.shape == (D, Wtot) and b_fused.shape == (1, Wtot)
    out_dtype = x.dtype if out_dtype is None else out_dtype

    # Generation-aware VMEM budget (~48 MiB on v7x, ~96 MiB on v5e/v6e).
    cap = _vmem_capacity_bytes()
    budget = max(min(int(cap * 0.75), cap - (16 << 20)), 32 << 20)

    in_b = jnp.dtype(compute_dtype).itemsize
    out_b = jnp.dtype(out_dtype).itemsize

    if block_n is None:
        block_n = _choose_block_n(N, T, D, Wtot, k_pad, v_pad,
                                  in_b, in_b, out_b, budget)
    assert N % block_n == 0
    if tq is None:
        tq = _choose_tq(T, block_n, v_pad, max(budget // 4, 2 << 20))
    assert T % tq == 0

    kernel = functools.partial(_attn_kernel, kp=k_pad, vp=v_pad, tq=tq,
                               compute_dtype=compute_dtype)

    def build(weight_pipeline):
        wkw = {} if weight_pipeline is None else dict(pipeline_mode=weight_pipeline)
        return pl.pallas_call(
            kernel,
            out_shape=jax.ShapeDtypeStruct((N, T, v_pad), out_dtype),
            grid_spec=pltpu.PrefetchScalarGridSpec(
                num_scalar_prefetch=0,
                grid=(N // block_n,),
                in_specs=[
                    pl.BlockSpec((block_n, T, D), lambda n: (n, 0, 0)),   # x block
                    pl.BlockSpec((D, Wtot), lambda n: (0, 0), **wkw),     # fused W (resident)
                    pl.BlockSpec((1, Wtot), lambda n: (0, 0), **wkw),     # fused b (resident)
                ],
                out_specs=pl.BlockSpec((block_n, T, v_pad), lambda n: (n, 0, 0)),
            ),
            compiler_params=pltpu.CompilerParams(
                dimension_semantics=("parallel",),
                vmem_limit_bytes=int(budget)),
        )

    x_c = x.astype(compute_dtype)
    try:
        # Single-buffer the resident weight/bias (constant index maps).
        out_padded = build(pl.Buffered(1))(x_c, w_fused, b_fused)
    except Exception:
        # Fallback: default double-buffered resident weights.
        out_padded = build(None)(x_c, w_fused, b_fused)

    if return_padded or v_dim == v_pad:
        return out_padded
    # Default preserves module semantics; pass return_padded=True to skip the
    # extra HBM pass when the consumer tolerates lane padding.
    return out_padded[..., :v_dim]


def self_attention(x, wq, bq, wk, bk, wv, bv, *, k_dim,
                   compute_dtype=jnp.float32, **kwargs):
    """Convenience wrapper (packs per call; prefer pack_qkv_params once + packed call)."""
    w_fused, b_fused, meta = pack_qkv_params(wq, bq, wk, bk, wv, bv,
                                             k_dim=k_dim, compute_dtype=compute_dtype)
    return self_attention_packed(x, w_fused, b_fused,
                                 compute_dtype=compute_dtype, **meta, **kwargs)


def _reference(x, wq, bq, wk, bk, wv, bv, *, k_dim):
    q = x @ wq + bq
    k = x @ wk + bk
    v = x @ wv + bv
    s = jnp.einsum("ntd,nsd->nts", q, k) / math.sqrt(k_dim)
    p = jax.nn.softmax(s, axis=2)
    return jnp.einsum("nts,nsd->ntd", p, v)


def _make_params(key, D, k_dim, v_dim):
    kwq, kbq, kwk, kbk, kwv, kbv = jax.random.split(key, 6)
    bound = 1.0 / math.sqrt(D)
    wq = jax.random.uniform(kwq, (D, k_dim), jnp.float32, -bound, bound)
    bq = jax.random.uniform(kbq, (k_dim,), jnp.float32, -bound, bound)
    wk = jax.random.uniform(kwk, (D, k_dim), jnp.float32, -bound, bound)
    bk = jax.random.uniform(kbk, (k_dim,), jnp.float32, -bound, bound)
    wv = jax.random.uniform(kwv, (D, v_dim), jnp.float32, -bound, bound)
    bv = jax.random.uniform(kbv, (v_dim,), jnp.float32, -bound, bound)
    return wq, bq, wk, bk, wv, bv


if __name__ == "__main__":
    root = jax.random.PRNGKey(0)
    kx1, kp1, kx2, kp2 = jax.random.split(root, 4)

    # --- config 1: small module-consistent shapes (N, T, D) = (2, 8, 32) ----
    N, T, D, k_dim, v_dim = 2, 8, 32, 16, 16
    x = jax.random.normal(kx1, (N, T, D), dtype=jnp.float32)
    params = _make_params(kp1, D, k_dim, v_dim)
    ref = _reference(x, *params, k_dim=k_dim)

    # f32 MXU path; weights packed ONCE (hoisted out of the forward path).
    wf, bf, meta = pack_qkv_params(*params, k_dim=k_dim, compute_dtype=jnp.float32)
    out = self_attention_packed(x, wf, bf, compute_dtype=jnp.float32, **meta)
    out = jax.block_until_ready(out)
    assert out.shape == (N, T, v_dim), out.shape
    assert jnp.allclose(out, ref, atol=5e-3, rtol=5e-3), "f32 mismatch vs reference"

    # bf16 MXU-operand path with bf16 output store (f32 accumulation/softmax).
    wf16, bf16, meta16 = pack_qkv_params(*params, k_dim=k_dim,
                                         compute_dtype=jnp.bfloat16)
    out16 = self_attention_packed(x, wf16, bf16, compute_dtype=jnp.bfloat16,
                                  out_dtype=jnp.bfloat16, **meta16)
    out16 = jax.block_until_ready(out16)
    assert out16.shape == (N, T, v_dim), out16.shape
    assert jnp.allclose(out16.astype(jnp.float32), ref, atol=5e-2, rtol=5e-2), \
        "bf16 mismatch vs reference"

    # --- config 2: exercise the query-tiled softmax path and a >=2-step grid ---
    N2, T2, D2, k2, v2 = 4, 64, 32, 16, 32
    x2 = jax.random.normal(kx2, (N2, T2, D2), dtype=jnp.float32)
    params2 = _make_params(kp2, D2, k2, v2)
    ref2 = _reference(x2, *params2, k_dim=k2)

    wf2, bf2, meta2 = pack_qkv_params(*params2, k_dim=k2, compute_dtype=jnp.float32)
    out2 = self_attention_packed(x2, wf2, bf2, compute_dtype=jnp.float32,
                                 tq=16, **meta2)   # force the tiled path
    out2 = jax.block_until_ready(out2)
    assert out2.shape == (N2, T2, v2), out2.shape
    assert jnp.allclose(out2, ref2, atol=5e-3, rtol=5e-3), "tiled-path mismatch"

    print("KERNEL_OK")
</pallas_src>

<mosaic_0001>
module attributes {stable_mosaic.version = 11 : i64} {
  func.func @_attn_kernel(%arg0: i32, %arg1: memref<1x8x32xf32, #tpu.memory_space<vmem>>, %arg2: memref<32x384xf32, #tpu.memory_space<vmem>>, %arg3: memref<1x384xf32, #tpu.memory_space<vmem>>, %arg4: memref<1x8x128xf32, #tpu.memory_space<vmem>>) attributes {dimension_semantics = [#tpu.dimension_semantics<parallel>], iteration_bounds = array<i64: 2>, scalar_prefetch = 0 : i64, scratch_operands = 0 : i64, tpu.core_type = #tpu.core_type<tc>, window_params = [{transform_indices = @transform_0, window_bounds = array<i64: 1, 8, 32>}, {pipeline_mode = #tpu.pipeline_mode<synchronous>, transform_indices = @transform_1, window_bounds = array<i64: 32, 384>}, {pipeline_mode = #tpu.pipeline_mode<synchronous>, transform_indices = @transform_2, window_bounds = array<i64: 1, 384>}, {transform_indices = @transform_3, window_bounds = array<i64: 1, 8, 128>}]} {
    %c0 = arith.constant 0 : index
    %c0_0 = arith.constant 0 : index
    %c0_1 = arith.constant 0 : index
    %0 = vector.load %arg1[%c0, %c0_0, %c0_1] : memref<1x8x32xf32, #tpu.memory_space<vmem>>, vector<1x8x32xf32>
    %1 = vector.shape_cast %0 : vector<1x8x32xf32> to vector<8x32xf32>
    %c0_2 = arith.constant 0 : index
    %c0_3 = arith.constant 0 : index
    %2 = vector.load %arg2[%c0_2, %c0_3] : memref<32x384xf32, #tpu.memory_space<vmem>>, vector<32x384xf32>
    %cst = arith.constant dense<0.000000e+00> : vector<8x384xf32>
    %3 = tpu.matmul %1, %2, %cst {dimension_numbers = #tpu.dot_dimension_numbers<[1], [0], [0], [1], [0, 0, 1, 1], [], []>} : vector<8x32xf32>, vector<32x384xf32>, vector<8x384xf32> -> vector<8x384xf32>
    %c0_4 = arith.constant 0 : index
    %c0_5 = arith.constant 0 : index
    %4 = vector.load %arg3[%c0_4, %c0_5] : memref<1x384xf32, #tpu.memory_space<vmem>>, vector<1x384xf32>
    %5 = vector.broadcast %4 : vector<1x384xf32> to vector<8x384xf32>
    %6 = arith.addf %3, %5 : vector<8x384xf32>
    %7 = vector.shape_cast %6 : vector<8x384xf32> to vector<1x8x384xf32>
    %8 = vector.extract_strided_slice %7 {offsets = [0, 0, 0], sizes = [1, 8, 128], strides = [1, 1, 1]} : vector<1x8x384xf32> to vector<1x8x128xf32>
    %9 = vector.extract_strided_slice %7 {offsets = [0, 0, 128], sizes = [1, 8, 128], strides = [1, 1, 1]} : vector<1x8x384xf32> to vector<1x8x128xf32>
    %10 = vector.extract_strided_slice %7 {offsets = [0, 0, 256], sizes = [1, 8, 128], strides = [1, 1, 1]} : vector<1x8x384xf32> to vector<1x8x128xf32>
    "tpu.trace_start"() <{level = 10 : i32, message = "bqd,bkd->bqk"}> : () -> ()
    %cst_6 = arith.constant dense<0.000000e+00> : vector<1x8x8xf32>
    %11 = tpu.matmul %8, %9, %cst_6 {dimension_numbers = #tpu.dot_dimension_numbers<[2], [2], [1], [1], [0, 0, 0, 1, 1, 1], [0], [0]>} : vector<1x8x128xf32>, vector<1x8x128xf32>, vector<1x8x8xf32> -> vector<1x8x8xf32>
    "tpu.trace_stop"() : () -> ()
    %cst_7 = arith.constant dense<0xFF800000> : vector<1x8xf32>
    %12 = vector.multi_reduction <maximumf>, %11, %cst_7 [2] : vector<1x8x8xf32> to vector<1x8xf32>
    %13 = vector.shape_cast %12 : vector<1x8xf32> to vector<1x8x1xf32>
    %14 = vector.broadcast %13 : vector<1x8x1xf32> to vector<1x8x8xf32>
    %15 = arith.subf %11, %14 : vector<1x8x8xf32>
    %16 = math.exp %15 : vector<1x8x8xf32>
    %cst_8 = arith.constant dense<0.000000e+00> : vector<1x8xf32>
    %17 = vector.multi_reduction <add>, %16, %cst_8 [2] : vector<1x8x8xf32> to vector<1x8xf32>
    %18 = vector.shape_cast %17 : vector<1x8xf32> to vector<1x8x1xf32>
    %19 = tpu.reciprocal %18 {approx = true} : vector<1x8x1xf32> -> vector<1x8x1xf32>
    %20 = vector.broadcast %19 : vector<1x8x1xf32> to vector<1x8x8xf32>
    %21 = arith.mulf %16, %20 : vector<1x8x8xf32>
    "tpu.trace_start"() <{level = 10 : i32, message = "bqk,bkd->bqd"}> : () -> ()
    %cst_9 = arith.constant dense<0.000000e+00> : vector<1x8x128xf32>
    %22 = tpu.matmul %21, %10, %cst_9 {dimension_numbers = #tpu.dot_dimension_numbers<[2], [1], [1], [2], [0, 0, 0, 1, 1, 2], [0], [0]>} : vector<1x8x8xf32>, vector<1x8x128xf32>, vector<1x8x128xf32> -> vector<1x8x128xf32>
    "tpu.trace_stop"() : () -> ()
    %c0_10 = arith.constant 0 : index
    %c0_11 = arith.constant 0 : index
    %c0_12 = arith.constant 0 : index
    %23 = vector.load %arg4[%c0_10, %c0_11, %c0_12] : memref<1x8x128xf32, #tpu.memory_space<vmem>>, vector<1x8x128xf32>
    tpu.vector_store %arg4[%c0_10, %c0_11, %c0_12], %22 {strides = array<i32>} : memref<1x8x128xf32, #tpu.memory_space<vmem>>, vector<1x8x128xf32>,
    return
  }
  func.func @transform_0(%arg0: i32) -> (i32, i32, i32) {
    %c0_i32 = arith.constant 0 : i32
    %c0_i32_0 = arith.constant 0 : i32
    %c0_i32_1 = arith.constant 0 : i32
    return %arg0, %c0_i32, %c0_i32_0 : i32, i32, i32
  }
  func.func @transform_1(%arg0: i32) -> (i32, i32) {
    %c0_i32 = arith.constant 0 : i32
    %c0_i32_0 = arith.constant 0 : i32
    %c0_i32_1 = arith.constant 0 : i32
    return %c0_i32, %c0_i32_0 : i32, i32
  }
  func.func @transform_2(%arg0: i32) -> (i32, i32) {
    %c0_i32 = arith.constant 0 : i32
    %c0_i32_0 = arith.constant 0 : i32
    %c0_i32_1 = arith.constant 0 : i32
    return %c0_i32, %c0_i32_0 : i32, i32
  }
  func.func @transform_3(%arg0: i32) -> (i32, i32, i32) {
    %c0_i32 = arith.constant 0 : i32
    %c0_i32_0 = arith.constant 0 : i32
    %c0_i32_1 = arith.constant 0 : i32
    return %arg0, %c0_i32, %c0_i32_0 : i32, i32, i32
  }
}

module attributes {stable_mosaic.version = 11 : i64} {
  func.func @_attn_kernel(%arg0: i32, %arg1: memref<1x8x32xf32, #tpu.memory_space<vmem>>, %arg2: memref<32x384xf32, #tpu.memory_space<vmem>>, %arg3: memref<1x384xf32, #tpu.memory_space<vmem>>, %arg4: memref<1x8x128xf32, #tpu.memory_space<vmem>>) attributes {dimension_semantics = [#tpu.dimension_semantics<parallel>], iteration_bounds = array<i64: 2>, scalar_prefetch = 0 : i64, scratch_operands = 0 : i64, tpu.core_type = #tpu.core_type<tc>, window_params = [{transform_indices = @transform_0, window_bounds = array<i64: 1, 8, 32>}, {pipeline_mode = #tpu.pipeline_mode<synchronous>, transform_indices = @transform_1, window_bounds = array<i64: 32, 384>}, {pipeline_mode = #tpu.pipeline_mode<synchronous>, transform_indices = @transform_2, window_bounds = array<i64: 1, 384>}, {transform_indices = @transform_3, window_bounds = array<i64: 1, 8, 128>}]} {
    %c0 = arith.constant 0 : index
    %c0_0 = arith.constant 0 : index
    %c0_1 = arith.constant 0 : index
    %0 = vector.load %arg1[%c0, %c0_0, %c0_1] : memref<1x8x32xf32, #tpu.memory_space<vmem>>, vector<1x8x32xf32>
    %1 = vector.shape_cast %0 : vector<1x8x32xf32> to vector<8x32xf32>
    %c0_2 = arith.constant 0 : index
    %c0_3 = arith.constant 0 : index
    %2 = vector.load %arg2[%c0_2, %c0_3] : memref<32x384xf32, #tpu.memory_space<vmem>>, vector<32x384xf32>
    %cst = arith.constant dense<0.000000e+00> : vector<8x384xf32>
    %3 = tpu.matmul %1, %2, %cst {dimension_numbers = #tpu.dot_dimension_numbers<[1], [0], [0], [1], [0, 0, 1, 1], [], []>} : vector<8x32xf32>, vector<32x384xf32>, vector<8x384xf32> -> vector<8x384xf32>
    %c0_4 = arith.constant 0 : index
    %c0_5 = arith.constant 0 : index
    %4 = vector.load %arg3[%c0_4, %c0_5] : memref<1x384xf32, #tpu.memory_space<vmem>>, vector<1x384xf32>
    %5 = vector.broadcast %4 : vector<1x384xf32> to vector<8x384xf32>
    %6 = arith.addf %3, %5 : vector<8x384xf32>
    %7 = vector.shape_cast %6 : vector<8x384xf32> to vector<1x8x384xf32>
    %8 = vector.extract_strided_slice %7 {offsets = [0, 0, 0], sizes = [1, 8, 128], strides = [1, 1, 1]} : vector<1x8x384xf32> to vector<1x8x128xf32>
    %9 = vector.extract_strided_slice %7 {offsets = [0, 0, 128], sizes = [1, 8, 128], strides = [1, 1, 1]} : vector<1x8x384xf32> to vector<1x8x128xf32>
    %10 = vector.extract_strided_slice %7 {offsets = [0, 0, 256], sizes = [1, 8, 128], strides = [1, 1, 1]} : vector<1x8x384xf32> to vector<1x8x128xf32>
    "tpu.trace_start"() <{level = 10 : i32, message = "bqd,bkd->bqk"}> : () -> ()
    %cst_6 = arith.constant dense<0.000000e+00> : vector<1x8x8xf32>
    %11 = tpu.matmul %8, %9, %cst_6 {dimension_numbers = #tpu.dot_dimension_numbers<[2], [2], [1], [1], [0, 0, 0, 1, 1, 1], [0], [0]>} : vector<1x8x128xf32>, vector<1x8x128xf32>, vector<1x8x8xf32> -> vector<1x8x8xf32>
    "tpu.trace_stop"() : () -> ()
    %cst_7 = arith.constant dense<0xFF800000> : vector<1x8xf32>
    %12 = vector.multi_reduction <maximumf>, %11, %cst_7 [2] : vector<1x8x8xf32> to vector<1x8xf32>
    %13 = vector.shape_cast %12 : vector<1x8xf32> to vector<1x8x1xf32>
    %14 = vector.broadcast %13 : vector<1x8x1xf32> to vector<1x8x8xf32>
    %15 = arith.subf %11, %14 : vector<1x8x8xf32>
    %16 = math.exp %15 : vector<1x8x8xf32>
    %cst_8 = arith.constant dense<0.000000e+00> : vector<1x8xf32>
    %17 = vector.multi_reduction <add>, %16, %cst_8 [2] : vector<1x8x8xf32> to vector<1x8xf32>
    %18 = vector.shape_cast %17 : vector<1x8xf32> to vector<1x8x1xf32>
    %19 = tpu.reciprocal %18 {approx = true} : vector<1x8x1xf32> -> vector<1x8x1xf32>
    %20 = vector.broadcast %19 : vector<1x8x1xf32> to vector<1x8x8xf32>
    %21 = arith.mulf %16, %20 : vector<1x8x8xf32>
    "tpu.trace_start"() <{level = 10 : i32, message = "bqk,bkd->bqd"}> : () -> ()
    %cst_9 = arith.constant dense<0.000000e+00> : vector<1x8x128xf32>
    %22 = tpu.matmul %21, %10, %cst_9 {dimension_numbers = #tpu.dot_dimension_numbers<[2], [1], [1], [2], [0, 0, 0, 1, 1, 2], [0], [0]>} : vector<1x8x8xf32>, vector<1x8x128xf32>, vector<1x8x128xf32> -> vector<1x8x128xf32>
    "tpu.trace_stop"() : () -> ()
    %c0_10 = arith.constant 0 : index
    %c0_11 = arith.constant 0 : index
    %c0_12 = arith.constant 0 : index
    %23 = vector.load %arg4[%c0_10, %c0_11, %c0_12] : memref<1x8x128xf32, #tpu.memory_space<vmem>>, vector<1x8x128xf32>
    tpu.vector_store %arg4[%c0_10, %c0_11, %c0_12], %22 {strides = array<i32>} : memref<1x8x128xf32, #tpu.memory_space<vmem>>, vector<1x8x128xf32>,
    return
  }
  func.func @transform_0(%arg0: i32) -> (i32, i32, i32) {
    %c0_i32 = arith.constant 0 : i32
    %c0_i32_0 = arith.constant 0 : i32
    %c0_i32_1 = arith.constant 0 : i32
    return %arg0, %c0_i32, %c0_i32_0 : i32, i32, i32
  }
  func.func @transform_1(%arg0: i32) -> (i32, i32) {
    %c0_i32 = arith.constant 0 : i32
    %c0_i32_0 = arith.constant 0 : i32
    %c0_i32_1 = arith.constant 0 : i32
    return %c0_i32, %c0_i32_0 : i32, i32
  }
  func.func @transform_2(%arg0: i32) -> (i32, i32) {
    %c0_i32 = arith.constant 0 : i32
    %c0_i32_0 = arith.constant 0 : i32
    %c0_i32_1 = arith.constant 0 : i32
    return %c0_i32, %c0_i32_0 : i32, i32
  }
  func.func @transform_3(%arg0: i32) -> (i32, i32, i32) {
    %c0_i32 = arith.constant 0 : i32
    %c0_i32_0 = arith.constant 0 : i32
    %c0_i32_1 = arith.constant 0 : i32
    return %arg0, %c0_i32, %c0_i32_0 : i32, i32, i32
  }
}

</mosaic_0001>

<llo_original>
// kernel: tpu_custom_call.1
$region0: #{tpu_custom_call.1}
  #allocation0 [shape = 'u32[]', space=smem, size = 0x4, offset = 0x4, fixed_abs, tag = 'smem constant byte address 0x4 - core index']
  #allocation1 [shape = 'u32[72,128]{1,0:T(1,128)}', space=vmem, size = 0x9000, scoped, tag = 'internal scratch']
  %s0 = inlined_call_operand.hbm [shape: f32[2,8,32], index: 0, kind: input, shape index: {}]
  %s1 = inlined_call_operand.hbm [shape: f32[32,384], index: 1, kind: input, shape index: {}]
  %s2 = inlined_call_operand.hbm [shape: f32[1,384], index: 2, kind: input, shape index: {}]
  %s3 = inlined_call_operand.hbm [shape: f32[2,8,128], index: 3, kind: output, shape index: {}]
  %s4 = sld [smem:[#allocation0]]
  $region57: #{tpu_custom_call.1} parent=0
    _
  %s6 = ssub.s32 1, %s4
  %s7 = scalar_select 0, %s6, %s4
  $region1: #{tpu_custom_call.1} parent=0
    #allocation2 [shape = 'u8[8192]{0}', space=vmem, size = 0x2000, scoped, tag = 'input window, operand 0']
    #allocation3 [shape = 's32[2]{0}', space=sflag, size = 0x8, scoped, tag = 'scoped memory for tpu_custom_call.1']
    #allocation4 [shape = 's32[2]{0}', space=sflag, size = 0x8, scoped, tag = 'scoped memory for tpu_custom_call.1']
    #allocation5 [shape = 'u8[49152]{0}', space=vmem, size = 0xc000, scoped, tag = 'input window, operand 1, single buffered']
    #allocation6 [shape = 's32[1]{0}', space=sflag, size = 0x4, scoped, tag = 'scoped memory for tpu_custom_call.1']
    #allocation7 [shape = 'u8[1536]{0}', space=vmem, size = 0x800, scoped, tag = 'input window, operand 2, single buffered']
    #allocation8 [shape = 'u8[8192]{0}', space=vmem, size = 0x2000, scoped, tag = 'output window, operand 0']
    %8 = vsyncpa [#allocation3], 0
    %s9 = scalar_lea.sflag [#allocation3], 1
    %10 = vsyncpa %s9, 0
    %11 = vsyncpa [#allocation6], 0
    %12 = vsyncpa [#allocation4], 0
    %s13 = scalar_lea.sflag [#allocation4], 1
    %14 = vsyncpa %s13, 0
    loop: start=0, step=1, limit=4
    $region2: #{tpu_custom_call.1} parent=1 // loop_pre_header
      _
    $region3: #{tpu_custom_call.1} parent=1 // loop_header
      %s16 = sphi 0, %s20
      %p17 = scmp.ge.s32.totalorder %s16, 4
      %s26 = sphi 0, %s28
      %s29 = sphi 0, %s26
      %s30 = sphi 0, %s29
      %s46 = sphi 0, %s30
      %s50 = sphi 0, %s50
      %s52 = sphi 0, %s50
      %s53 = sphi 0, %s52
      %s67 = sphi 0, %s53
      %s71 = sphi 0, %s71
      %s73 = sphi 0, %s71
      %s74 = sphi 0, %s73
      %s88 = sphi 0, %s74
      %s94 = sphi 0, %s96
      %s97 = sphi 0, %s94
      %s98 = sphi 0, %s97
      %s114 = sphi 0, %s98
    $region4: #{tpu_custom_call.1} parent=1 // loop_header_branch
      %19 = sbr.rel (%p17) target = $region8
    $region5: #{tpu_custom_call.1} parent=1 // loop_body
      %s21 = ssub.s32 %s16, 1
      %s22 = ssub.s32 %s16, 2
      %s23 = sadd.s32 %s16, 1
      %s24 = ssub.s32 %s16, %s23
      %p25 = scmp.eq.s32.totalorder %s24, 0
      %s27 = sadd.s32 %s26, 1
      %s28 = scalar_select %p25, %s26, %s27
      %p31 = pneg %p25
      %p32 = scmp.eq.s32.totalorder %s16, 1
      %p33 = por %p31, %p32
      %p34 = scmp.ne.s32.totalorder %s26, %s29
      %p35 = scmp.eq.s32.totalorder %s16, 0
      %p36 = por %p34, %p35
      %p37 = scmp.ne.s32.totalorder %s26, %s29
      %p38 = scmp.eq.s32.totalorder %s21, 1
      %p39 = por %p37, %p38
      %p40 = scmp.ne.s32.totalorder %s29, %s30
      %p41 = scmp.eq.s32.totalorder %s21, 0
      %p42 = por %p40, %p41
      %p43 = scmp.ne.s32.totalorder %s29, %s30
      %p44 = scmp.eq.s32.totalorder %s22, 1
      %p45 = por %p43, %p44
      %p47 = scmp.ne.s32.totalorder %s30, %s46
      %p48 = scmp.eq.s32.totalorder %s22, 0
      %p49 = por %p47, %p48
      %s51 = sadd.s32 %s50, 1
      %p54 = scmp.eq.s32.totalorder %s16, 1
      %p55 = scmp.ne.s32.totalorder %s50, %s52
      %p56 = scmp.eq.s32.totalorder %s16, 0
      %p57 = por %p55, %p56
      %p58 = scmp.ne.s32.totalorder %s50, %s52
      %p59 = scmp.eq.s32.totalorder %s21, 1
      %p60 = por %p58, %p59
      %p61 = scmp.ne.s32.totalorder %s52, %s53
      %p62 = scmp.eq.s32.totalorder %s21, 0
      %p63 = por %p61, %p62
      %p64 = scmp.ne.s32.totalorder %s52, %s53
      %p65 = scmp.eq.s32.totalorder %s22, 1
      %p66 = por %p64, %p65
      %p68 = scmp.ne.s32.totalorder %s53, %s67
      %p69 = scmp.eq.s32.totalorder %s22, 0
      %p70 = por %p68, %p69
      %s72 = sadd.s32 %s71, 1
      %p75 = scmp.eq.s32.totalorder %s16, 1
      %p76 = scmp.ne.s32.totalorder %s71, %s73
      %p77 = scmp.eq.s32.totalorder %s16, 0
      %p78 = por %p76, %p77
      %p79 = scmp.ne.s32.totalorder %s71, %s73
      %p80 = scmp.eq.s32.totalorder %s21, 1
      %p81 = por %p79, %p80
      %p82 = scmp.ne.s32.totalorder %s73, %s74
      %p83 = scmp.eq.s32.totalorder %s21, 0
      %p84 = por %p82, %p83
      %p85 = scmp.ne.s32.totalorder %s73, %s74
      %p86 = scmp.eq.s32.totalorder %s22, 1
      %p87 = por %p85, %p86
      %p89 = scmp.ne.s32.totalorder %s74, %s88
      %p90 = scmp.eq.s32.totalorder %s22, 0
      %p91 = por %p89, %p90
      %s92 = ssub.s32 %s16, %s23
      %p93 = scmp.eq.s32.totalorder %s92, 0
      %s95 = sadd.s32 %s94, 1
      %s96 = scalar_select %p93, %s94, %s95
      %p99 = pneg %p93
      %p100 = scmp.eq.s32.totalorder %s16, 1
      %p101 = por %p99, %p100
      %p102 = scmp.ne.s32.totalorder %s94, %s97
      %p103 = scmp.eq.s32.totalorder %s16, 0
      %p104 = por %p102, %p103
      %p105 = scmp.ne.s32.totalorder %s94, %s97
      %p106 = scmp.eq.s32.totalorder %s21, 1
      %p107 = por %p105, %p106
      %p108 = scmp.ne.s32.totalorder %s97, %s98
      %p109 = scmp.eq.s32.totalorder %s21, 0
      %p110 = por %p108, %p109
      %p111 = scmp.ne.s32.totalorder %s97, %s98
      %p112 = scmp.eq.s32.totalorder %s22, 1
      %p113 = por %p111, %p112
      %p115 = scmp.ne.s32.totalorder %s98, %s114
      %p116 = scmp.eq.s32.totalorder %s22, 0
      %p117 = por %p115, %p116
      %p118 = scmp.le.s32.totalorder 1, %s16
      %p119 = scmp.lt.s32.totalorder %s16, 3
      %p120 = pnand %p118, %p119
      %p121 = pneg %p120
      // Predicated region
      $region9: #{tpu_custom_call.1} parent=5 // pred_check
        _
      $region10: #{tpu_custom_call.1} parent=5 // pred_check_branch
        %123 = sbr.rel (%p120) target = $region12
      $region11: #{tpu_custom_call.1} parent=5 // pred_region
        %s124 = ssub.s32 %s16, 1
        // Predicated region
        $region13: #{tpu_custom_call.1} parent=11 // pred_check
          %p125 = pneg %p63
        $region14: #{tpu_custom_call.1} parent=11 // pred_check_branch
          %127 = sbr.rel (%p125) target = $region16
        $region15: #{tpu_custom_call.1} parent=11 // pred_region
          %129 = vsyncadd [#allocation6], 0
          %s130 = sshll.u32 %s1, 4
          %s131 = int_to_ptr.hbm [resolvable:$true] %s130
          %s132 = sshll.u32 [#allocation5], 4
          %s133 = int_to_ptr.vmem [resolvable:$true] %s132
          %138 = dma.hbm_to_vmem [thread:$0]  %s131, 1536, %s133, [#allocation6], 384, 384, 24
        $region16: #{tpu_custom_call.1} parent=11 // pred_fallthru
          _
        // Predicated region
        $region17: #{tpu_custom_call.1} parent=11 // pred_check
          %p139 = pneg %p84
        $region18: #{tpu_custom_call.1} parent=11 // pred_check_branch
          %141 = sbr.rel (%p139) target = $region20
        $region19: #{tpu_custom_call.1} parent=11 // pred_region
          %143 = vsyncadd [#allocation6], 0
          %s145 = sshll.u32 %s2, 4
          %s146 = int_to_ptr.hbm [resolvable:$true] %s145
          %s147 = sshll.u32 [#allocation7], 4
          %s148 = int_to_ptr.vmem [resolvable:$true] %s147
          %150 = dma.hbm_to_vmem [thread:$0]  %s146, 48, %s148, [#allocation6]
        $region20: #{tpu_custom_call.1} parent=11 // pred_fallthru
          _
      $region12: #{tpu_custom_call.1} parent=5 // pred_fallthru
        _
      %p151 = scmp.lt.s32.totalorder %s16, 2
      // Predicated region
      $region21: #{tpu_custom_call.1} parent=5 // pred_check
        %p152 = pneg %p151
      $region22: #{tpu_custom_call.1} parent=5 // pred_check_branch
        %154 = sbr.rel (%p152) target = $region24
      $region23: #{tpu_custom_call.1} parent=5 // pred_region
        // Predicated region
        $region25: #{tpu_custom_call.1} parent=23 // pred_check
          %p155 = pneg %p36
        $region26: #{tpu_custom_call.1} parent=23 // pred_check_branch
          %157 = sbr.rel (%p155) target = $region28
        $region27: #{tpu_custom_call.1} parent=23 // pred_region
          %s158 = sand.u32 %s26, 1
          %s159 = scalar_lea.sflag [#allocation3], %s158
          %s160 = sand.u32 %s26, 1
          %s161 = smul.addr %s160, 8
          %s162 = scalar_lea.vmem [#allocation2], %s161
          %164 = vsyncadd %s159, 0
          %s165 = smul.addr %s16, 8
          %s166 = scalar_lea.hbm %s0, %s165
          %s168 = sshll.u32 %s166, 4
          %s169 = int_to_ptr.hbm [resolvable:$true] %s168
          %s170 = sshll.u32 %s162, 4
          %s171 = int_to_ptr.vmem [resolvable:$true] %s170
          %173 = dma.hbm_to_vmem [thread:$0]  %s169, 128, %s171, %s159
        $region28: #{tpu_custom_call.1} parent=23 // pred_fallthru
          _
      $region24: #{tpu_custom_call.1} parent=5 // pred_fallthru
        _
      %p174 = scmp.le.s32.totalorder 1, %s16
      %p175 = scmp.lt.s32.totalorder %s16, 3
      %p176 = pnand %p174, %p175
      %p177 = pneg %p176
      // Predicated region
      $region29: #{tpu_custom_call.1} parent=5 // pred_check
        _
      $region30: #{tpu_custom_call.1} parent=5 // pred_check_branch
        %179 = sbr.rel (%p176) target = $region32
      $region31: #{tpu_custom_call.1} parent=5 // pred_region
        %s180 = ssub.s32 %s16, 1
        %s181 = sand.u32 %s29, 1
        %s182 = scalar_lea.sflag [#allocation3], %s181
        %s183 = sand.u32 %s29, 1
        %s184 = smul.addr %s183, 8
        %s185 = scalar_lea.vmem [#allocation2], %s184
        // Predicated region
        $region33: #{tpu_custom_call.1} parent=31 // pred_check
          %p186 = pneg %p42
        $region34: #{tpu_custom_call.1} parent=31 // pred_check_branch
          %188 = sbr.rel (%p186) target = $region36
        $region35: #{tpu_custom_call.1} parent=31 // pred_region
          %190 = dma.done %s182, 128
        $region36: #{tpu_custom_call.1} parent=31 // pred_fallthru
          _
        // Predicated region
        $region37: #{tpu_custom_call.1} parent=31 // pred_check
          %p191 = pneg %p63
        $region38: #{tpu_custom_call.1} parent=31 // pred_check_branch
          %193 = sbr.rel (%p191) target = $region40
        $region39: #{tpu_custom_call.1} parent=31 // pred_region
          %195 = dma.done [#allocation6], 1536
        $region40: #{tpu_custom_call.1} parent=31 // pred_fallthru
          _
        // Predicated region
        $region41: #{tpu_custom_call.1} parent=31 // pred_check
          %p196 = pneg %p84
        $region42: #{tpu_custom_call.1} parent=31 // pred_check_branch
          %198 = sbr.rel (%p196) target = $region44
        $region43: #{tpu_custom_call.1} parent=31 // pred_region
          %200 = dma.done [#allocation6], 48
        $region44: #{tpu_custom_call.1} parent=31 // pred_fallthru
          _
        %s201 = sand.u32 %s29, 1
        %s202 = scalar_lea.sflag [#allocation3], %s201
        %s203 = sand.u32 %s29, 1
        %s204 = smul.addr %s203, 8
        %s205 = scalar_lea.vmem [#allocation2], %s204
        %p206 = pneg %p42
        %p207 = pneg %p39
        %p208 = pneg %p63
        %p209 = pneg %p60
        %p210 = pneg %p84
        %p211 = pneg %p81
        %p212 = pneg %p110
        %p213 = pneg %p107
        %s214 = sand.u32 %s97, 1
        %s215 = scalar_lea.sflag [#allocation4], %s214
        %s216 = sand.u32 %s97, 1
        %s217 = smul.addr %s216, 8
        %s218 = scalar_lea.vmem [#allocation8], %s217
        %v219 = vld [vmem:[%s185] sm:$0xff]
        %v220 = vld [vmem:[#allocation5] sm:$0xff]
        %v221 = vld [vmem:[#allocation5 + $0x8] sm:$0xff]
        %v222 = vld [vmem:[#allocation5 + $0x10] sm:$0xff]
        %v223 = vld [vmem:[#allocation5 + $0x18] sm:$0xff]
        %v224 = vld [vmem:[#allocation5 + $0x20] sm:$0xff]
        %v225 = vld [vmem:[#allocation5 + $0x28] sm:$0xff]
        %v226 = vld [vmem:[#allocation5 + $0x30] sm:$0xff]
        %v227 = vld [vmem:[#allocation5 + $0x38] sm:$0xff]
        %v228 = vld [vmem:[#allocation5 + $0x40] sm:$0xff]
        %v229 = vld [vmem:[#allocation5 + $0x48] sm:$0xff]
        %v230 = vld [vmem:[#allocation5 + $0x50] sm:$0xff]
        %v231 = vld [vmem:[#allocation5 + $0x58] sm:$0xff]
        %v232 = vld [vmem:[#allocation7] sm:$0x7]
        %v234 = vperm.slane %v232, 0
        %v235 = vperm.slane %v232, 1
        %v236 = vperm.slane %v232, 2
        %vm240 = vcmask 261120
        %v242 = vsel %vm240, %v219, 0
        %244 = vmatpush.msra.mxu0 0.0
        %245 = vmatpush.msra.mxu0 0.0
        %246 = vmatpush.msra.mxu0 0.0
        %247 = vmatpush.msra.mxu0 0.0
        %248 = vmatpush.msra.mxu0 0.0
        %249 = vmatpush.msra.mxu0 0.0
        %250 = vmatpush.msra.mxu0 0.0
        %251 = vmatpush.msra.mxu0 0.0
        %252 = vmatpush.msra.mxu0 0.0
        %253 = vmatpush.msra.mxu0 0.0
        %254 = vmatpush.msra.mxu0 0.0
        %255 = vmatpush.msra.mxu0 0.0
        %256 = vmatpush.msra.mxu0 %v229
        %257 = vmatpush.msra.mxu0 %v226
        %258 = vmatpush.msra.mxu0 %v223
        %259 = vmatpush.msra.mxu0 %v220
        %260 = vmatmul.f32.gmra.mxu0 %v242
        %v261 = vpop.f32.mrf.mxu0
        %v262 = vadd.f32 %v234, %v261
        %263 = vdwg.mxu0
        %264 = vmatpush.msra.mxu0 0.0
        %265 = vmatpush.msra.mxu0 0.0
        %266 = vmatpush.msra.mxu0 0.0
        %267 = vmatpush.msra.mxu0 0.0
        %268 = vmatpush.msra.mxu0 0.0
        %269 = vmatpush.msra.mxu0 0.0
        %270 = vmatpush.msra.mxu0 0.0
        %271 = vmatpush.msra.mxu0 0.0
        %272 = vmatpush.msra.mxu0 0.0
        %273 = vmatpush.msra.mxu0 0.0
        %274 = vmatpush.msra.mxu0 0.0
        %275 = vmatpush.msra.mxu0 0.0
        %276 = vmatpush.msra.mxu0 %v230
        %277 = vmatpush.msra.mxu0 %v227
        %278 = vmatpush.msra.mxu0 %v224
        %279 = vmatpush.msra.mxu0 %v221
        %280 = vmatmul.f32.gmra.mxu0 %v242
        %v281 = vpop.f32.mrf.mxu0
        %v282 = vadd.f32 %v235, %v281
        %283 = vdwg.mxu0
        %284 = vmatpush.msra.mxu0 0.0
        %285 = vmatpush.msra.mxu0 0.0
        %286 = vmatpush.msra.mxu0 0.0
        %287 = vmatpush.msra.mxu0 0.0
        %288 = vmatpush.msra.mxu0 0.0
        %289 = vmatpush.msra.mxu0 0.0
        %290 = vmatpush.msra.mxu0 0.0
        %291 = vmatpush.msra.mxu0 0.0
        %292 = vmatpush.msra.mxu0 0.0
        %293 = vmatpush.msra.mxu0 0.0
        %294 = vmatpush.msra.mxu0 0.0
        %295 = vmatpush.msra.mxu0 0.0
        %296 = vmatpush.msra.mxu0 %v231
        %297 = vmatpush.msra.mxu0 %v228
        %298 = vmatpush.msra.mxu0 %v225
        %299 = vmatpush.msra.mxu0 %v222
        %300 = vmatmul.f32.gmra.mxu0 %v242
        %v301 = vpop.f32.mrf.mxu0
        %v302 = vadd.f32 %v236, %v301
        %303 = vdwg.mxu0
        %304 = vmatpush.xpose.msra.mxu0 0.0
        %305 = vmatpush.xpose.msra.mxu0 0.0
        %306 = vmatpush.xpose.msra.mxu0 0.0
        %307 = vmatpush.xpose.msra.mxu0 0.0
        %308 = vmatpush.xpose.msra.mxu0 0.0
        %309 = vmatpush.xpose.msra.mxu0 0.0
        %310 = vmatpush.xpose.msra.mxu0 0.0
        %311 = vmatpush.xpose.msra.mxu0 0.0
        %312 = vmatpush.xpose.msra.mxu0 0.0
        %313 = vmatpush.xpose.msra.mxu0 0.0
        %314 = vmatpush.xpose.msra.mxu0 0.0
        %315 = vmatpush.xpose.msra.mxu0 0.0
        %316 = vmatpush.xpose.msra.mxu0 0.0
        %317 = vmatpush.xpose.msra.mxu0 0.0
        %318 = vmatpush.xpose.msra.mxu0 0.0
        %319 = vmatpush.xpose.msra.mxu0 %v282
        %320 = vmatmul.f32.gmra.mxu0 %v262
        %v321 = vpop.f32.mrf.mxu0
        %v322 = vadd.f32 0.0, %v321
        %323 = vdwg.mxu0
        %vm324 = vcmask 64512
        %v325 = vsel %vm324, %v322, -inf
        %326 = vmax.xlane.f32.xlu0 %v325
        %v327 = vpop.xlane.xlu0 %326
        %v328 = vsub.f32 %v322, %v327
        %v329 = vmul.f32 %v328, 1.442695
        %v330 = vpow.pop %v329
        %v331 = vsel %vm324, %v330, 0.0
        %332 = vadd.xlane.f32.xlu0 %v331
        %v333 = vpop.xlane.xlu0 %332
        %v334 = vrcp.pop %v333
        %v335 = vmul.f32 %v330, %v334
        %v337 = vsel %vm324, %v335, 0
        %339 = vmatpush.msra.mxu0 0.0
        %340 = vmatpush.msra.mxu0 0.0
        %341 = vmatpush.msra.mxu0 0.0
        %342 = vmatpush.msra.mxu0 0.0
        %343 = vmatpush.msra.mxu0 0.0
        %344 = vmatpush.msra.mxu0 0.0
        %345 = vmatpush.msra.mxu0 0.0
        %346 = vmatpush.msra.mxu0 0.0
        %347 = vmatpush.msra.mxu0 0.0
        %348 = vmatpush.msra.mxu0 0.0
        %349 = vmatpush.msra.mxu0 0.0
        %350 = vmatpush.msra.mxu0 0.0
        %351 = vmatpush.msra.mxu0 0.0
        %352 = vmatpush.msra.mxu0 0.0
        %353 = vmatpush.msra.mxu0 0.0
        %354 = vmatpush.msra.mxu0 %v302
        %355 = vmatmul.f32.gmra.mxu0 %v337
        %v356 = vpop.f32.mrf.mxu0
        %v357 = vadd.f32 0.0, %v356
        %358 = vdwg.mxu0
        %359 = vst [vmem:[%s218] sm:$0xff] %v357
        %s360 = sand.u32 %s97, 1
        %s361 = scalar_lea.sflag [#allocation4], %s360
        %s362 = sand.u32 %s97, 1
        %s363 = smul.addr %s362, 8
        %s364 = scalar_lea.vmem [#allocation8], %s363
        // Predicated region
        $region45: #{tpu_custom_call.1} parent=31 // pred_check
          %p365 = pneg %p107
        $region46: #{tpu_custom_call.1} parent=31 // pred_check_branch
          %367 = sbr.rel (%p365) target = $region48
        $region47: #{tpu_custom_call.1} parent=31 // pred_region
          %369 = vsyncadd %s361, 0
          %s370 = smul.addr %s21, 8
          %s371 = scalar_lea.hbm %s3, %s370
          %s373 = sshll.u32 %s364, 4
          %s374 = int_to_ptr.vmem [resolvable:$true] %s373
          %s375 = sshll.u32 %s371, 4
          %s376 = int_to_ptr.hbm [resolvable:$true] %s375
          %378 = dma.vmem_to_hbm [thread:$0]  %s374, 128, %s376, %s361
        $region48: #{tpu_custom_call.1} parent=31 // pred_fallthru
          _
      $region32: #{tpu_custom_call.1} parent=5 // pred_fallthru
        _
      %p379 = scmp.le.s32.totalorder 2, %s16
      // Predicated region
      $region49: #{tpu_custom_call.1} parent=5 // pred_check
        %p380 = pneg %p379
      $region50: #{tpu_custom_call.1} parent=5 // pred_check_branch
        %382 = sbr.rel (%p380) target = $region52
      $region51: #{tpu_custom_call.1} parent=5 // pred_region
        %s383 = ssub.s32 %s16, 2
        // Predicated region
        $region53: #{tpu_custom_call.1} parent=51 // pred_check
          %p384 = pneg %p113
        $region54: #{tpu_custom_call.1} parent=51 // pred_check_branch
          %386 = sbr.rel (%p384) target = $region56
        $region55: #{tpu_custom_call.1} parent=51 // pred_region
          %s387 = sand.u32 %s98, 1
          %s388 = scalar_lea.sflag [#allocation4], %s387
          %s389 = sand.u32 %s98, 1
          %s390 = smul.addr %s389, 8
          %s391 = scalar_lea.vmem [#allocation8], %s390
          %393 = dma.done %s388, 128
        $region56: #{tpu_custom_call.1} parent=51 // pred_fallthru
          _
      $region52: #{tpu_custom_call.1} parent=5 // pred_fallthru
        _
    $region6: #{tpu_custom_call.1} parent=1 // loop_footer
      %s20 = sadd.s32 1, %s16
    $region7: #{tpu_custom_call.1} parent=1 // loop_footer_branch
      %15 = sbr.rel target = $region3
    $region8: #{tpu_custom_call.1} parent=1 // loop_exit
      _
    %394 = vsyncpa [#allocation3], 1
    %s395 = scalar_lea.sflag [#allocation3], 1
    %396 = vsyncpa %s395, 1
    %397 = vsyncpa [#allocation6], 1
    %398 = vsyncpa [#allocation4], 1
    %s399 = scalar_lea.sflag [#allocation4], 1
    %400 = vsyncpa %s399, 1

// kernel: tpu_custom_call.1
$region0: #{tpu_custom_call.1}
  #allocation0 [shape = 'u32[]', space=smem, size = 0x4, offset = 0x4, fixed_abs, tag = 'smem constant byte address 0x4 - core index']
  #allocation1 [shape = 'u32[72,128]{1,0:T(1,128)}', space=vmem, size = 0x9000, scoped, tag = 'internal scratch']
  %s0 = inlined_call_operand.hbm [shape: f32[2,8,32], index: 0, kind: input, shape index: {}]
  %s1 = inlined_call_operand.hbm [shape: f32[32,384], index: 1, kind: input, shape index: {}]
  %s2 = inlined_call_operand.hbm [shape: f32[1,384], index: 2, kind: input, shape index: {}]
  %s3 = inlined_call_operand.hbm [shape: f32[2,8,128], index: 3, kind: output, shape index: {}]
  %s4 = sld [smem:[#allocation0]]
  $region57: #{tpu_custom_call.1} parent=0
    _
  %s6 = ssub.s32 1, %s4
  %s7 = scalar_select 0, %s6, %s4
  $region1: #{tpu_custom_call.1} parent=0
    #allocation2 [shape = 'u8[8192]{0}', space=vmem, size = 0x2000, scoped, tag = 'input window, operand 0']
    #allocation3 [shape = 's32[2]{0}', space=sflag, size = 0x8, scoped, tag = 'scoped memory for tpu_custom_call.1']
    #allocation4 [shape = 's32[2]{0}', space=sflag, size = 0x8, scoped, tag = 'scoped memory for tpu_custom_call.1']
    #allocation5 [shape = 'u8[49152]{0}', space=vmem, size = 0xc000, scoped, tag = 'input window, operand 1, single buffered']
    #allocation6 [shape = 's32[1]{0}', space=sflag, size = 0x4, scoped, tag = 'scoped memory for tpu_custom_call.1']
    #allocation7 [shape = 'u8[1536]{0}', space=vmem, size = 0x800, scoped, tag = 'input window, operand 2, single buffered']
    #allocation8 [shape = 'u8[8192]{0}', space=vmem, size = 0x2000, scoped, tag = 'output window, operand 0']
    %8 = vsyncpa [#allocation3], 0
    %s9 = scalar_lea.sflag [#allocation3], 1
    %10 = vsyncpa %s9, 0
    %11 = vsyncpa [#allocation6], 0
    %12 = vsyncpa [#allocation4], 0
    %s13 = scalar_lea.sflag [#allocation4], 1
    %14 = vsyncpa %s13, 0
    loop: start=0, step=1, limit=4
    $region2: #{tpu_custom_call.1} parent=1 // loop_pre_header
      _
    $region3: #{tpu_custom_call.1} parent=1 // loop_header
      %s16 = sphi 0, %s20
      %p17 = scmp.ge.s32.totalorder %s16, 4
      %s26 = sphi 0, %s28
      %s29 = sphi 0, %s26
      %s30 = sphi 0, %s29
      %s46 = sphi 0, %s30
      %s50 = sphi 0, %s50
      %s52 = sphi 0, %s50
      %s53 = sphi 0, %s52
      %s67 = sphi 0, %s53
      %s71 = sphi 0, %s71
      %s73 = sphi 0, %s71
      %s74 = sphi 0, %s73
      %s88 = sphi 0, %s74
      %s94 = sphi 0, %s96
      %s97 = sphi 0, %s94
      %s98 = sphi 0, %s97
      %s114 = sphi 0, %s98
    $region4: #{tpu_custom_call.1} parent=1 // loop_header_branch
      %19 = sbr.rel (%p17) target = $region8
    $region5: #{tpu_custom_call.1} parent=1 // loop_body
      %s21 = ssub.s32 %s16, 1
      %s22 = ssub.s32 %s16, 2
      %s23 = sadd.s32 %s16, 1
      %s24 = ssub.s32 %s16, %s23
      %p25 = scmp.eq.s32.totalorder %s24, 0
      %s27 = sadd.s32 %s26, 1
      %s28 = scalar_select %p25, %s26, %s27
      %p31 = pneg %p25
      %p32 = scmp.eq.s32.totalorder %s16, 1
      %p33 = por %p31, %p32
      %p34 = scmp.ne.s32.totalorder %s26, %s29
      %p35 = scmp.eq.s32.totalorder %s16, 0
      %p36 = por %p34, %p35
      %p37 = scmp.ne.s32.totalorder %s26, %s29
      %p38 = scmp.eq.s32.totalorder %s21, 1
      %p39 = por %p37, %p38
      %p40 = scmp.ne.s32.totalorder %s29, %s30
      %p41 = scmp.eq.s32.totalorder %s21, 0
      %p42 = por %p40, %p41
      %p43 = scmp.ne.s32.totalorder %s29, %s30
      %p44 = scmp.eq.s32.totalorder %s22, 1
      %p45 = por %p43, %p44
      %p47 = scmp.ne.s32.totalorder %s30, %s46
      %p48 = scmp.eq.s32.totalorder %s22, 0
      %p49 = por %p47, %p48
      %s51 = sadd.s32 %s50, 1
      %p54 = scmp.eq.s32.totalorder %s16, 1
      %p55 = scmp.ne.s32.totalorder %s50, %s52
      %p56 = scmp.eq.s32.totalorder %s16, 0
      %p57 = por %p55, %p56
      %p58 = scmp.ne.s32.totalorder %s50, %s52
      %p59 = scmp.eq.s32.totalorder %s21, 1
      %p60 = por %p58, %p59
      %p61 = scmp.ne.s32.totalorder %s52, %s53
      %p62 = scmp.eq.s32.totalorder %s21, 0
      %p63 = por %p61, %p62
      %p64 = scmp.ne.s32.totalorder %s52, %s53
      %p65 = scmp.eq.s32.totalorder %s22, 1
      %p66 = por %p64, %p65
      %p68 = scmp.ne.s32.totalorder %s53, %s67
      %p69 = scmp.eq.s32.totalorder %s22, 0
      %p70 = por %p68, %p69
      %s72 = sadd.s32 %s71, 1
      %p75 = scmp.eq.s32.totalorder %s16, 1
      %p76 = scmp.ne.s32.totalorder %s71, %s73
      %p77 = scmp.eq.s32.totalorder %s16, 0
      %p78 = por %p76, %p77
      %p79 = scmp.ne.s32.totalorder %s71, %s73
      %p80 = scmp.eq.s32.totalorder %s21, 1
      %p81 = por %p79, %p80
      %p82 = scmp.ne.s32.totalorder %s73, %s74
      %p83 = scmp.eq.s32.totalorder %s21, 0
      %p84 = por %p82, %p83
      %p85 = scmp.ne.s32.totalorder %s73, %s74
      %p86 = scmp.eq.s32.totalorder %s22, 1
      %p87 = por %p85, %p86
      %p89 = scmp.ne.s32.totalorder %s74, %s88
      %p90 = scmp.eq.s32.totalorder %s22, 0
      %p91 = por %p89, %p90
      %s92 = ssub.s32 %s16, %s23
      %p93 = scmp.eq.s32.totalorder %s92, 0
      %s95 = sadd.s32 %s94, 1
      %s96 = scalar_select %p93, %s94, %s95
      %p99 = pneg %p93
      %p100 = scmp.eq.s32.totalorder %s16, 1
      %p101 = por %p99, %p100
      %p102 = scmp.ne.s32.totalorder %s94, %s97
      %p103 = scmp.eq.s32.totalorder %s16, 0
      %p104 = por %p102, %p103
      %p105 = scmp.ne.s32.totalorder %s94, %s97
      %p106 = scmp.eq.s32.totalorder %s21, 1
      %p107 = por %p105, %p106
      %p108 = scmp.ne.s32.totalorder %s97, %s98
      %p109 = scmp.eq.s32.totalorder %s21, 0
      %p110 = por %p108, %p109
      %p111 = scmp.ne.s32.totalorder %s97, %s98
      %p112 = scmp.eq.s32.totalorder %s22, 1
      %p113 = por %p111, %p112
      %p115 = scmp.ne.s32.totalorder %s98, %s114
      %p116 = scmp.eq.s32.totalorder %s22, 0
      %p117 = por %p115, %p116
      %p118 = scmp.le.s32.totalorder 1, %s16
      %p119 = scmp.lt.s32.totalorder %s16, 3
      %p120 = pnand %p118, %p119
      %p121 = pneg %p120
      // Predicated region
      $region9: #{tpu_custom_call.1} parent=5 // pred_check
        _
      $region10: #{tpu_custom_call.1} parent=5 // pred_check_branch
        %123 = sbr.rel (%p120) target = $region12
      $region11: #{tpu_custom_call.1} parent=5 // pred_region
        %s124 = ssub.s32 %s16, 1
        // Predicated region
        $region13: #{tpu_custom_call.1} parent=11 // pred_check
          %p125 = pneg %p63
        $region14: #{tpu_custom_call.1} parent=11 // pred_check_branch
          %127 = sbr.rel (%p125) target = $region16
        $region15: #{tpu_custom_call.1} parent=11 // pred_region
          %129 = vsyncadd [#allocation6], 0
          %s130 = sshll.u32 %s1, 4
          %s131 = int_to_ptr.hbm [resolvable:$true] %s130
          %s132 = sshll.u32 [#allocation5], 4
          %s133 = int_to_ptr.vmem [resolvable:$true] %s132
          %138 = dma.hbm_to_vmem [thread:$0]  %s131, 1536, %s133, [#allocation6], 384, 384, 24
        $region16: #{tpu_custom_call.1} parent=11 // pred_fallthru
          _
        // Predicated region
        $region17: #{tpu_custom_call.1} parent=11 // pred_check
          %p139 = pneg %p84
        $region18: #{tpu_custom_call.1} parent=11 // pred_check_branch
          %141 = sbr.rel (%p139) target = $region20
        $region19: #{tpu_custom_call.1} parent=11 // pred_region
          %143 = vsyncadd [#allocation6], 0
          %s145 = sshll.u32 %s2, 4
          %s146 = int_to_ptr.hbm [resolvable:$true] %s145
          %s147 = sshll.u32 [#allocation7], 4
          %s148 = int_to_ptr.vmem [resolvable:$true] %s147
          %150 = dma.hbm_to_vmem [thread:$0]  %s146, 48, %s148, [#allocation6]
        $region20: #{tpu_custom_call.1} parent=11 // pred_fallthru
          _
      $region12: #{tpu_custom_call.1} parent=5 // pred_fallthru
        _
      %p151 = scmp.lt.s32.totalorder %s16, 2
      // Predicated region
      $region21: #{tpu_custom_call.1} parent=5 // pred_check
        %p152 = pneg %p151
      $region22: #{tpu_custom_call.1} parent=5 // pred_check_branch
        %154 = sbr.rel (%p152) target = $region24
      $region23: #{tpu_custom_call.1} parent=5 // pred_region
        // Predicated region
        $region25: #{tpu_custom_call.1} parent=23 // pred_check
          %p155 = pneg %p36
        $region26: #{tpu_custom_call.1} parent=23 // pred_check_branch
          %157 = sbr.rel (%p155) target = $region28
        $region27: #{tpu_custom_call.1} parent=23 // pred_region
          %s158 = sand.u32 %s26, 1
          %s159 = scalar_lea.sflag [#allocation3], %s158
          %s160 = sand.u32 %s26, 1
          %s161 = smul.addr %s160, 8
          %s162 = scalar_lea.vmem [#allocation2], %s161
          %164 = vsyncadd %s159, 0
          %s165 = smul.addr %s16, 8
          %s166 = scalar_lea.hbm %s0, %s165
          %s168 = sshll.u32 %s166, 4
          %s169 = int_to_ptr.hbm [resolvable:$true] %s168
          %s170 = sshll.u32 %s162, 4
          %s171 = int_to_ptr.vmem [resolvable:$true] %s170
          %173 = dma.hbm_to_vmem [thread:$0]  %s169, 128, %s171, %s159
        $region28: #{tpu_custom_call.1} parent=23 // pred_fallthru
          _
      $region24: #{tpu_custom_call.1} parent=5 // pred_fallthru
        _
      %p174 = scmp.le.s32.totalorder 1, %s16
      %p175 = scmp.lt.s32.totalorder %s16, 3
      %p176 = pnand %p174, %p175
      %p177 = pneg %p176
      // Predicated region
      $region29: #{tpu_custom_call.1} parent=5 // pred_check
        _
      $region30: #{tpu_custom_call.1} parent=5 // pred_check_branch
        %179 = sbr.rel (%p176) target = $region32
      $region31: #{tpu_custom_call.1} parent=5 // pred_region
        %s180 = ssub.s32 %s16, 1
        %s181 = sand.u32 %s29, 1
        %s182 = scalar_lea.sflag [#allocation3], %s181
        %s183 = sand.u32 %s29, 1
        %s184 = smul.addr %s183, 8
        %s185 = scalar_lea.vmem [#allocation2], %s184
        // Predicated region
        $region33: #{tpu_custom_call.1} parent=31 // pred_check
          %p186 = pneg %p42
        $region34: #{tpu_custom_call.1} parent=31 // pred_check_branch
          %188 = sbr.rel (%p186) target = $region36
        $region35: #{tpu_custom_call.1} parent=31 // pred_region
          %190 = dma.done %s182, 128
        $region36: #{tpu_custom_call.1} parent=31 // pred_fallthru
          _
        // Predicated region
        $region37: #{tpu_custom_call.1} parent=31 // pred_check
          %p191 = pneg %p63
        $region38: #{tpu_custom_call.1} parent=31 // pred_check_branch
          %193 = sbr.rel (%p191) target = $region40
        $region39: #{tpu_custom_call.1} parent=31 // pred_region
          %195 = dma.done [#allocation6], 1536
        $region40: #{tpu_custom_call.1} parent=31 // pred_fallthru
          _
        // Predicated region
        $region41: #{tpu_custom_call.1} parent=31 // pred_check
          %p196 = pneg %p84
        $region42: #{tpu_custom_call.1} parent=31 // pred_check_branch
          %198 = sbr.rel (%p196) target = $region44
        $region43: #{tpu_custom_call.1} parent=31 // pred_region
          %200 = dma.done [#allocation6], 48
        $region44: #{tpu_custom_call.1} parent=31 // pred_fallthru
          _
        %s201 = sand.u32 %s29, 1
        %s202 = scalar_lea.sflag [#allocation3], %s201
        %s203 = sand.u32 %s29, 1
        %s204 = smul.addr %s203, 8
        %s205 = scalar_lea.vmem [#allocation2], %s204
        %p206 = pneg %p42
        %p207 = pneg %p39
        %p208 = pneg %p63
        %p209 = pneg %p60
        %p210 = pneg %p84
        %p211 = pneg %p81
        %p212 = pneg %p110
        %p213 = pneg %p107
        %s214 = sand.u32 %s97, 1
        %s215 = scalar_lea.sflag [#allocation4], %s214
        %s216 = sand.u32 %s97, 1
        %s217 = smul.addr %s216, 8
        %s218 = scalar_lea.vmem [#allocation8], %s217
        %v219 = vld [vmem:[%s185] sm:$0xff]
        %v220 = vld [vmem:[#allocation5] sm:$0xff]
        %v221 = vld [vmem:[#allocation5 + $0x8] sm:$0xff]
        %v222 = vld [vmem:[#allocation5 + $0x10] sm:$0xff]
        %v223 = vld [vmem:[#allocation5 + $0x18] sm:$0xff]
        %v224 = vld [vmem:[#allocation5 + $0x20] sm:$0xff]
        %v225 = vld [vmem:[#allocation5 + $0x28] sm:$0xff]
        %v226 = vld [vmem:[#allocation5 + $0x30] sm:$0xff]
        %v227 = vld [vmem:[#allocation5 + $0x38] sm:$0xff]
        %v228 = vld [vmem:[#allocation5 + $0x40] sm:$0xff]
        %v229 = vld [vmem:[#allocation5 + $0x48] sm:$0xff]
        %v230 = vld [vmem:[#allocation5 + $0x50] sm:$0xff]
        %v231 = vld [vmem:[#allocation5 + $0x58] sm:$0xff]
        %v232 = vld [vmem:[#allocation7] sm:$0x7]
        %v234 = vperm.slane %v232, 0
        %v235 = vperm.slane %v232, 1
        %v236 = vperm.slane %v232, 2
        %vm240 = vcmask 261120
        %v242 = vsel %vm240, %v219, 0
        %244 = vmatpush.msra.mxu0 0.0
        %245 = vmatpush.msra.mxu0 0.0
        %246 = vmatpush.msra.mxu0 0.0
        %247 = vmatpush.msra.mxu0 0.0
        %248 = vmatpush.msra.mxu0 0.0
        %249 = vmatpush.msra.mxu0 0.0
        %250 = vmatpush.msra.mxu0 0.0
        %251 = vmatpush.msra.mxu0 0.0
        %252 = vmatpush.msra.mxu0 0.0
        %253 = vmatpush.msra.mxu0 0.0
        %254 = vmatpush.msra.mxu0 0.0
        %255 = vmatpush.msra.mxu0 0.0
        %256 = vmatpush.msra.mxu0 %v229
        %257 = vmatpush.msra.mxu0 %v226
        %258 = vmatpush.msra.mxu0 %v223
        %259 = vmatpush.msra.mxu0 %v220
        %260 = vmatmul.f32.gmra.mxu0 %v242
        %v261 = vpop.f32.mrf.mxu0
        %v262 = vadd.f32 %v234, %v261
        %263 = vdwg.mxu0
        %264 = vmatpush.msra.mxu0 0.0
        %265 = vmatpush.msra.mxu0 0.0
        %266 = vmatpush.msra.mxu0 0.0
        %267 = vmatpush.msra.mxu0 0.0
        %268 = vmatpush.msra.mxu0 0.0
        %269 = vmatpush.msra.mxu0 0.0
        %270 = vmatpush.msra.mxu0 0.0
        %271 = vmatpush.msra.mxu0 0.0
        %272 = vmatpush.msra.mxu0 0.0
        %273 = vmatpush.msra.mxu0 0.0
        %274 = vmatpush.msra.mxu0 0.0
        %275 = vmatpush.msra.mxu0 0.0
        %276 = vmatpush.msra.mxu0 %v230
        %277 = vmatpush.msra.mxu0 %v227
        %278 = vmatpush.msra.mxu0 %v224
        %279 = vmatpush.msra.mxu0 %v221
        %280 = vmatmul.f32.gmra.mxu0 %v242
        %v281 = vpop.f32.mrf.mxu0
        %v282 = vadd.f32 %v235, %v281
        %283 = vdwg.mxu0
        %284 = vmatpush.msra.mxu0 0.0
        %285 = vmatpush.msra.mxu0 0.0
        %286 = vmatpush.msra.mxu0 0.0
        %287 = vmatpush.msra.mxu0 0.0
        %288 = vmatpush.msra.mxu0 0.0
        %289 = vmatpush.msra.mxu0 0.0
        %290 = vmatpush.msra.mxu0 0.0
        %291 = vmatpush.msra.mxu0 0.0
        %292 = vmatpush.msra.mxu0 0.0
        %293 = vmatpush.msra.mxu0 0.0
        %294 = vmatpush.msra.mxu0 0.0
        %295 = vmatpush.msra.mxu0 0.0
        %296 = vmatpush.msra.mxu0 %v231
        %297 = vmatpush.msra.mxu0 %v228
        %298 = vmatpush.msra.mxu0 %v225
        %299 = vmatpush.msra.mxu0 %v222
        %300 = vmatmul.f32.gmra.mxu0 %v242
        %v301 = vpop.f32.mrf.mxu0
        %v302 = vadd.f32 %v236, %v301
        %303 = vdwg.mxu0
        %304 = vmatpush.xpose.msra.mxu0 0.0
        %305 = vmatpush.xpose.msra.mxu0 0.0
        %306 = vmatpush.xpose.msra.mxu0 0.0
        %307 = vmatpush.xpose.msra.mxu0 0.0
        %308 = vmatpush.xpose.msra.mxu0 0.0
        %309 = vmatpush.xpose.msra.mxu0 0.0
        %310 = vmatpush.xpose.msra.mxu0 0.0
        %311 = vmatpush.xpose.msra.mxu0 0.0
        %312 = vmatpush.xpose.msra.mxu0 0.0
        %313 = vmatpush.xpose.msra.mxu0 0.0
        %314 = vmatpush.xpose.msra.mxu0 0.0
        %315 = vmatpush.xpose.msra.mxu0 0.0
        %316 = vmatpush.xpose.msra.mxu0 0.0
        %317 = vmatpush.xpose.msra.mxu0 0.0
        %318 = vmatpush.xpose.msra.mxu0 0.0
        %319 = vmatpush.xpose.msra.mxu0 %v282
        %320 = vmatmul.f32.gmra.mxu0 %v262
        %v321 = vpop.f32.mrf.mxu0
        %v322 = vadd.f32 0.0, %v321
        %323 = vdwg.mxu0
        %vm324 = vcmask 64512
        %v325 = vsel %vm324, %v322, -inf
        %326 = vmax.xlane.f32.xlu0 %v325
        %v327 = vpop.xlane.xlu0 %326
        %v328 = vsub.f32 %v322, %v327
        %v329 = vmul.f32 %v328, 1.442695
        %v330 = vpow.pop %v329
        %v331 = vsel %vm324, %v330, 0.0
        %332 = vadd.xlane.f32.xlu0 %v331
        %v333 = vpop.xlane.xlu0 %332
        %v334 = vrcp.pop %v333
        %v335 = vmul.f32 %v330, %v334
        %v337 = vsel %vm324, %v335, 0
        %339 = vmatpush.msra.mxu0 0.0
        %340 = vmatpush.msra.mxu0 0.0
        %341 = vmatpush.msra.mxu0 0.0
        %342 = vmatpush.msra.mxu0 0.0
        %343 = vmatpush.msra.mxu0 0.0
        %344 = vmatpush.msra.mxu0 0.0
        %345 = vmatpush.msra.mxu0 0.0
        %346 = vmatpush.msra.mxu0 0.0
        %347 = vmatpush.msra.mxu0 0.0
        %348 = vmatpush.msra.mxu0 0.0
        %349 = vmatpush.msra.mxu0 0.0
        %350 = vmatpush.msra.mxu0 0.0
        %351 = vmatpush.msra.mxu0 0.0
        %352 = vmatpush.msra.mxu0 0.0
        %353 = vmatpush.msra.mxu0 0.0
        %354 = vmatpush.msra.mxu0 %v302
        %355 = vmatmul.f32.gmra.mxu0 %v337
        %v356 = vpop.f32.mrf.mxu0
        %v357 = vadd.f32 0.0, %v356
        %358 = vdwg.mxu0
        %359 = vst [vmem:[%s218] sm:$0xff] %v357
        %s360 = sand.u32 %s97, 1
        %s361 = scalar_lea.sflag [#allocation4], %s360
        %s362 = sand.u32 %s97, 1
        %s363 = smul.addr %s362, 8
        %s364 = scalar_lea.vmem [#allocation8], %s363
        // Predicated region
        $region45: #{tpu_custom_call.1} parent=31 // pred_check
          %p365 = pneg %p107
        $region46: #{tpu_custom_call.1} parent=31 // pred_check_branch
          %367 = sbr.rel (%p365) target = $region48
        $region47: #{tpu_custom_call.1} parent=31 // pred_region
          %369 = vsyncadd %s361, 0
          %s370 = smul.addr %s21, 8
          %s371 = scalar_lea.hbm %s3, %s370
          %s373 = sshll.u32 %s364, 4
          %s374 = int_to_ptr.vmem [resolvable:$true] %s373
          %s375 = sshll.u32 %s371, 4
          %s376 = int_to_ptr.hbm [resolvable:$true] %s375
          %378 = dma.vmem_to_hbm [thread:$0]  %s374, 128, %s376, %s361
        $region48: #{tpu_custom_call.1} parent=31 // pred_fallthru
          _
      $region32: #{tpu_custom_call.1} parent=5 // pred_fallthru
        _
      %p379 = scmp.le.s32.totalorder 2, %s16
      // Predicated region
      $region49: #{tpu_custom_call.1} parent=5 // pred_check
        %p380 = pneg %p379
      $region50: #{tpu_custom_call.1} parent=5 // pred_check_branch
        %382 = sbr.rel (%p380) target = $region52
      $region51: #{tpu_custom_call.1} parent=5 // pred_region
        %s383 = ssub.s32 %s16, 2
        // Predicated region
        $region53: #{tpu_custom_call.1} parent=51 // pred_check
          %p384 = pneg %p113
        $region54: #{tpu_custom_call.1} parent=51 // pred_check_branch
          %386 = sbr.rel (%p384) target = $region56
        $region55: #{tpu_custom_call.1} parent=51 // pred_region
          %s387 = sand.u32 %s98, 1
          %s388 = scalar_lea.sflag [#allocation4], %s387
          %s389 = sand.u32 %s98, 1
          %s390 = smul.addr %s389, 8
          %s391 = scalar_lea.vmem [#allocation8], %s390
          %393 = dma.done %s388, 128
        $region56: #{tpu_custom_call.1} parent=51 // pred_fallthru
          _
      $region52: #{tpu_custom_call.1} parent=5 // pred_fallthru
        _
    $region6: #{tpu_custom_call.1} parent=1 // loop_footer
      %s20 = sadd.s32 1, %s16
    $region7: #{tpu_custom_call.1} parent=1 // loop_footer_branch
      %15 = sbr.rel target = $region3
    $region8: #{tpu_custom_call.1} parent=1 // loop_exit
      _
    %394 = vsyncpa [#allocation3], 1
    %s395 = scalar_lea.sflag [#allocation3], 1
    %396 = vsyncpa %s395, 1
    %397 = vsyncpa [#allocation6], 1
    %398 = vsyncpa [#allocation4], 1
    %s399 = scalar_lea.sflag [#allocation4], 1
    %400 = vsyncpa %s399, 1

</llo_original>
